<compile_context>
chip_gen: v7x
topology: tpu7x:2x2x1
jax: 0.10.0
libtpu: 0.0.40
codegen_flags: <defaults>
</compile_context>

<pallas_src>
import jax
import jax.numpy as jnp
from jax.experimental import pallas as pl
from jax.experimental.pallas import tpu as pltpu

IN_FEATURES = 784
HIDDEN = 100
OUT = 10
HIDDEN_PAD = 128   # lane-dense hidden width
OUT_PAD = 128      # lane-dense output width


def _round_up(n, m):
    return (n + m - 1) // m * m


def _pick_tile(batch, tb):
    """Batch-tile selection.

    - tiny batch: one 16-aligned tile (16 = bf16 sublane pack, also fine for f32)
    - small/medium batch: two tiles so the 'parallel' grid axis can be sharded
      across both v7x TensorCores (harmless on v5e/v6e)
    - large batch: TB=tb (default 1024) to amortize the ~0.35 us per-step
      pipeline overhead while staying well under v5e's 16 MiB scoped VMEM.
    """
    if batch <= 128:
        return _round_up(batch, 16)
    if batch <= 2 * tb:
        return _round_up((batch + 1) // 2, 16)
    return tb


def mlp_mnist_kernel(x_ref, w1_ref, b1_ref, w2_ref, b2_ref, out_ref):
    # x_ref:  (TB, 784)  f32       w1_ref: (784, 128) bf16   b1_ref: (1, 128) f32
    # w2_ref: (128, 128) bf16      b2_ref: (1, 128)  f32     out_ref: (TB, 128) bf16
    #
    # Cast the activations to bf16 on the VPU here (free under the DMA) instead
    # of doing a separate full-batch cast pass in HBM.
    x = x_ref[...].astype(jnp.bfloat16)

    # Hidden layer: bf16 MXU matmul with f32 accumulation, bias+ReLU in f32 (VPU).
    h = jnp.dot(x, w1_ref[...], preferred_element_type=jnp.float32)
    h = jnp.maximum(h + b1_ref[...], 0.0)

    # Output layer. Padded hidden lanes are exactly 0 (zero-padded W1/b1), so
    # they contribute nothing regardless of W2's padded rows (also zero).
    logits = jnp.dot(h.astype(jnp.bfloat16), w2_ref[...],
                     preferred_element_type=jnp.float32) + b2_ref[...]

    # Numerically stable log_softmax restricted to the first 10 (real) lanes.
    lane = jax.lax.broadcasted_iota(jnp.int32, logits.shape, 1)
    valid = lane < OUT
    masked = jnp.where(valid, logits, -jnp.inf)
    m = jnp.max(masked, axis=1, keepdims=True)
    shifted = logits - m
    p = jnp.where(valid, jnp.exp(shifted), 0.0)
    lse = jnp.log(jnp.sum(p, axis=1, keepdims=True))
    out_ref[...] = jnp.where(valid, shifted - lse, 0.0).astype(out_ref.dtype)


def mlp_mnist_forward(x_nchw, w1, b1, w2, b2, *, tb=1024):
    """x_nchw: (B, 1, 28, 28) float32. Returns (B, 10) log-probabilities (f32).

    Note: matmul inputs (and the stored log-probs) are bf16-rounded, so the
    result matches a bf16-MXU forward, not a bit-exact f32 PyTorch forward.
    The zero-padding of W2/b2 rows/lanes >= HIDDEN/OUT is a required invariant.
    """
    x2d = x_nchw.reshape(-1, IN_FEATURES)           # f32, no extra HBM pass
    batch = x2d.shape[0]

    # --- one-time weight preparation (lane-dense, bf16 for the MXU) ----------
    w1p = jnp.zeros((IN_FEATURES, HIDDEN_PAD), jnp.bfloat16)
    w1p = w1p.at[:, :HIDDEN].set(w1.astype(jnp.bfloat16))
    b1p = jnp.zeros((1, HIDDEN_PAD), jnp.float32).at[:, :HIDDEN].set(b1)
    w2p = jnp.zeros((HIDDEN_PAD, OUT_PAD), jnp.bfloat16)
    w2p = w2p.at[:HIDDEN, :OUT].set(w2.astype(jnp.bfloat16))
    b2p = jnp.zeros((1, OUT_PAD), jnp.float32).at[:, :OUT].set(b2)

    # --- batch tiling (no padding pass; ragged last tile handled by Pallas) --
    tb_eff = _pick_tile(batch, tb)
    grid = (pl.cdiv(batch, tb_eff),)

    out_bf16 = pl.pallas_call(
        mlp_mnist_kernel,
        out_shape=jax.ShapeDtypeStruct((batch, OUT_PAD), jnp.bfloat16),
        grid_spec=pltpu.PrefetchScalarGridSpec(
            num_scalar_prefetch=0,
            grid=grid,
            in_specs=[
                pl.BlockSpec((tb_eff, IN_FEATURES), lambda i: (i, 0)),      # x tile (f32)
                pl.BlockSpec((IN_FEATURES, HIDDEN_PAD), lambda i: (0, 0)),  # W1 (resident)
                pl.BlockSpec((1, HIDDEN_PAD), lambda i: (0, 0)),            # b1 (resident)
                pl.BlockSpec((HIDDEN_PAD, OUT_PAD), lambda i: (0, 0)),      # W2 (resident)
                pl.BlockSpec((1, OUT_PAD), lambda i: (0, 0)),               # b2 (resident)
            ],
            out_specs=pl.BlockSpec((tb_eff, OUT_PAD), lambda i: (i, 0)),
        ),
        compiler_params=pltpu.CompilerParams(
            dimension_semantics=("parallel",),
        ),
    )(x2d, w1p, b1p, w2p, b2p)

    # Slice off the padded lanes; return f32 to match the PyTorch module's dtype
    # (values are bf16-precision).  This touches only (batch, 10) elements.
    return out_bf16[:, :OUT].astype(jnp.float32)


def init_params(key):
    """Deterministic init mimicking nn.Linear default (uniform +-1/sqrt(fan_in))."""
    k1, k2, k3, k4 = jax.random.split(key, 4)
    bound1 = 1.0 / jnp.sqrt(float(IN_FEATURES))
    bound2 = 1.0 / jnp.sqrt(float(HIDDEN))
    # Stored as (in_features, out_features) i.e. transposed vs torch's (out, in).
    w1 = jax.random.uniform(k1, (IN_FEATURES, HIDDEN), jnp.float32, -bound1, bound1)
    b1 = jax.random.uniform(k2, (HIDDEN,), jnp.float32, -bound1, bound1)
    w2 = jax.random.uniform(k3, (HIDDEN, OUT), jnp.float32, -bound2, bound2)
    b2 = jax.random.uniform(k4, (OUT,), jnp.float32, -bound2, bound2)
    return w1, b1, w2, b2


if __name__ == "__main__":
    key = jax.random.PRNGKey(0)
    kx, kp = jax.random.split(key)

    # Small MNIST-like batch: (B=4, C=1, H=28, W=28) so the flatten gives 784.
    x = jax.random.normal(kx, (4, 1, 28, 28), jnp.float32)
    w1, b1, w2, b2 = init_params(kp)

    out = mlp_mnist_forward(x, w1, b1, w2, b2)
    out = jax.block_until_ready(out)
    assert out.shape == (4, 10), out.shape

    # Reference matching the kernel's bf16-input / f32-accumulate matmuls
    # (kernel additionally rounds the stored log-probs to bf16).
    x2d = x.reshape(-1, IN_FEATURES)
    x_bf = x2d.astype(jnp.bfloat16).astype(jnp.float32)
    w1_bf = w1.astype(jnp.bfloat16).astype(jnp.float32)
    w2_bf = w2.astype(jnp.bfloat16).astype(jnp.float32)
    h = jnp.maximum(x_bf @ w1_bf + b1, 0.0)
    h_bf = h.astype(jnp.bfloat16).astype(jnp.float32)
    logits = h_bf @ w2_bf + b2
    ref = jax.nn.log_softmax(logits, axis=1)
    assert jnp.allclose(out, ref, atol=3e-2, rtol=3e-2), (
        f"max abs err {jnp.max(jnp.abs(out - ref))}")

    # Loose check against the pure-f32 reference (bf16 rounding of matmul
    # inputs and of the stored log-probs).
    ref_f32 = jax.nn.log_softmax(
        jnp.maximum(x2d @ w1 + b1, 0.0) @ w2 + b2, axis=1)
    assert jnp.allclose(out, ref_f32, atol=1e-1, rtol=1e-1), (
        f"max abs err {jnp.max(jnp.abs(out - ref_f32))}")

    print("KERNEL_OK")
</pallas_src>

<mosaic_0001>
module attributes {stable_mosaic.version = 11 : i64} {
  func.func @mlp_mnist_kernel(%arg0: i32, %arg1: memref<16x784xf32, #tpu.memory_space<vmem>>, %arg2: memref<784x128xbf16, #tpu.memory_space<vmem>>, %arg3: memref<1x128xf32, #tpu.memory_space<vmem>>, %arg4: memref<128x128xbf16, #tpu.memory_space<vmem>>, %arg5: memref<1x128xf32, #tpu.memory_space<vmem>>, %arg6: memref<16x128xbf16, #tpu.memory_space<vmem>>) attributes {dimension_semantics = [#tpu.dimension_semantics<parallel>], iteration_bounds = array<i64: 1>, scalar_prefetch = 0 : i64, scratch_operands = 0 : i64, tpu.core_type = #tpu.core_type<tc>, window_params = [{transform_indices = @transform_0, window_bounds = array<i64: 16, 784>}, {pipeline_mode = #tpu.pipeline_mode<synchronous>, transform_indices = @transform_1, window_bounds = array<i64: 784, 128>}, {pipeline_mode = #tpu.pipeline_mode<synchronous>, transform_indices = @transform_2, window_bounds = array<i64: 1, 128>}, {pipeline_mode = #tpu.pipeline_mode<synchronous>, transform_indices = @transform_3, window_bounds = array<i64: 128, 128>}, {pipeline_mode = #tpu.pipeline_mode<synchronous>, transform_indices = @transform_4, window_bounds = array<i64: 1, 128>}, {transform_indices = @transform_5, window_bounds = array<i64: 16, 128>}]} {
    %c0 = arith.constant 0 : index
    %c0_0 = arith.constant 0 : index
    %0 = vector.load %arg1[%c0, %c0_0] : memref<16x784xf32, #tpu.memory_space<vmem>>, vector<16x784xf32>
    %1 = arith.truncf %0 : vector<16x784xf32> to vector<16x784xbf16>
    %c0_1 = arith.constant 0 : index
    %c0_2 = arith.constant 0 : index
    %2 = vector.load %arg2[%c0_1, %c0_2] : memref<784x128xbf16, #tpu.memory_space<vmem>>, vector<784x128xbf16>
    %cst = arith.constant dense<0.000000e+00> : vector<16x128xf32>
    %3 = tpu.matmul %1, %2, %cst {dimension_numbers = #tpu.dot_dimension_numbers<[1], [0], [0], [1], [0, 0, 1, 1], [], []>} : vector<16x784xbf16>, vector<784x128xbf16>, vector<16x128xf32> -> vector<16x128xf32>
    %c0_3 = arith.constant 0 : index
    %c0_4 = arith.constant 0 : index
    %4 = vector.load %arg3[%c0_3, %c0_4] : memref<1x128xf32, #tpu.memory_space<vmem>>, vector<1x128xf32>
    %5 = vector.broadcast %4 : vector<1x128xf32> to vector<16x128xf32>
    %6 = arith.addf %3, %5 : vector<16x128xf32>
    %cst_5 = arith.constant 0.000000e+00 : f32
    %7 = vector.broadcast %cst_5 : f32 to vector<16x128xf32>
    %8 = arith.maximumf %6, %7 : vector<16x128xf32>
    %9 = arith.truncf %8 : vector<16x128xf32> to vector<16x128xbf16>
    %c0_6 = arith.constant 0 : index
    %c0_7 = arith.constant 0 : index
    %10 = vector.load %arg4[%c0_6, %c0_7] : memref<128x128xbf16, #tpu.memory_space<vmem>>, vector<128x128xbf16>
    %cst_8 = arith.constant dense<0.000000e+00> : vector<16x128xf32>
    %11 = tpu.matmul %9, %10, %cst_8 {dimension_numbers = #tpu.dot_dimension_numbers<[1], [0], [0], [1], [0, 0, 1, 1], [], []>} : vector<16x128xbf16>, vector<128x128xbf16>, vector<16x128xf32> -> vector<16x128xf32>
    %c0_9 = arith.constant 0 : index
    %c0_10 = arith.constant 0 : index
    %12 = vector.load %arg5[%c0_9, %c0_10] : memref<1x128xf32, #tpu.memory_space<vmem>>, vector<1x128xf32>
    %13 = vector.broadcast %12 : vector<1x128xf32> to vector<16x128xf32>
    %14 = arith.addf %11, %13 : vector<16x128xf32>
    %15 = tpu.iota {dimensions = array<i32: 1>} : vector<16x128xi32>
    %c10_i32 = arith.constant 10 : i32
    %16 = vector.broadcast %c10_i32 : i32 to vector<16x128xi32>
    %17 = arith.cmpi slt, %15, %16 : vector<16x128xi32>
    %cst_11 = arith.constant 0xFF800000 : f32
    %18 = vector.broadcast %cst_11 : f32 to vector<16x128xf32>
    %19 = arith.select %17, %14, %18 : vector<16x128xi1>, vector<16x128xf32>
    %cst_12 = arith.constant dense<0xFF800000> : vector<16xf32>
    %20 = vector.multi_reduction <maximumf>, %19, %cst_12 [1] : vector<16x128xf32> to vector<16xf32>
    %21 = vector.shape_cast %20 : vector<16xf32> to vector<16x1xf32>
    %22 = vector.broadcast %21 : vector<16x1xf32> to vector<16x128xf32>
    %23 = arith.subf %14, %22 : vector<16x128xf32>
    %24 = math.exp %23 : vector<16x128xf32>
    %cst_13 = arith.constant 0.000000e+00 : f32
    %25 = vector.broadcast %cst_13 : f32 to vector<16x128xf32>
    %26 = arith.select %17, %24, %25 : vector<16x128xi1>, vector<16x128xf32>
    %cst_14 = arith.constant dense<0.000000e+00> : vector<16xf32>
    %27 = vector.multi_reduction <add>, %26, %cst_14 [1] : vector<16x128xf32> to vector<16xf32>
    %28 = vector.shape_cast %27 : vector<16xf32> to vector<16x1xf32>
    %29 = math.log %28 : vector<16x1xf32>
    %30 = vector.broadcast %29 : vector<16x1xf32> to vector<16x128xf32>
    %31 = arith.subf %23, %30 : vector<16x128xf32>
    %cst_15 = arith.constant 0.000000e+00 : f32
    %32 = vector.broadcast %cst_15 : f32 to vector<16x128xf32>
    %33 = arith.select %17, %31, %32 : vector<16x128xi1>, vector<16x128xf32>
    %34 = arith.truncf %33 : vector<16x128xf32> to vector<16x128xbf16>
    %c0_16 = arith.constant 0 : index
    %c0_17 = arith.constant 0 : index
    %35 = vector.load %arg6[%c0_16, %c0_17] : memref<16x128xbf16, #tpu.memory_space<vmem>>, vector<16x128xbf16>
    tpu.vector_store %arg6[%c0_16, %c0_17], %34 {strides = array<i32>} : memref<16x128xbf16, #tpu.memory_space<vmem>>, vector<16x128xbf16>,
    return
  }
  func.func @transform_0(%arg0: i32) -> (i32, i32) {
    %c0_i32 = arith.constant 0 : i32
    %c0_i32_0 = arith.constant 0 : i32
    return %arg0, %c0_i32 : i32, i32
  }
  func.func @transform_1(%arg0: i32) -> (i32, i32) {
    %c0_i32 = arith.constant 0 : i32
    %c0_i32_0 = arith.constant 0 : i32
    %c0_i32_1 = arith.constant 0 : i32
    return %c0_i32, %c0_i32_0 : i32, i32
  }
  func.func @transform_2(%arg0: i32) -> (i32, i32) {
    %c0_i32 = arith.constant 0 : i32
    %c0_i32_0 = arith.constant 0 : i32
    %c0_i32_1 = arith.constant 0 : i32
    return %c0_i32, %c0_i32_0 : i32, i32
  }
  func.func @transform_3(%arg0: i32) -> (i32, i32) {
    %c0_i32 = arith.constant 0 : i32
    %c0_i32_0 = arith.constant 0 : i32
    %c0_i32_1 = arith.constant 0 : i32
    return %c0_i32, %c0_i32_0 : i32, i32
  }
  func.func @transform_4(%arg0: i32) -> (i32, i32) {
    %c0_i32 = arith.constant 0 : i32
    %c0_i32_0 = arith.constant 0 : i32
    %c0_i32_1 = arith.constant 0 : i32
    return %c0_i32, %c0_i32_0 : i32, i32
  }
  func.func @transform_5(%arg0: i32) -> (i32, i32) {
    %c0_i32 = arith.constant 0 : i32
    %c0_i32_0 = arith.constant 0 : i32
    return %arg0, %c0_i32 : i32, i32
  }
}

</mosaic_0001>

<llo_original>
// kernel: tpu_custom_call.1
$region0: #{tpu_custom_call.1}
  #allocation0 [shape = 'u32[]', space=smem, size = 0x4, offset = 0x4, fixed_abs, tag = 'smem constant byte address 0x4 - core index']
  #allocation1 [shape = 'u32[144,128]{1,0:T(1,128)}', space=vmem, size = 0x12000, scoped, tag = 'internal scratch']
  %s0 = inlined_call_operand.hbm [shape: f32[4,784], index: 0, kind: input, shape index: {}]
  %s1 = inlined_call_operand.hbm [shape: bf16[784,128], index: 1, kind: input, shape index: {}]
  %s2 = inlined_call_operand.vmem [shape: f32[1,128], index: 2, kind: input, shape index: {}]
  %s3 = inlined_call_operand.hbm [shape: bf16[128,128], index: 3, kind: input, shape index: {}]
  %s4 = inlined_call_operand.vmem [shape: f32[1,128], index: 4, kind: input, shape index: {}]
  %s5 = inlined_call_operand.hbm [shape: bf16[4,128], index: 5, kind: output, shape index: {}]
  %s6 = sld [smem:[#allocation0]]
  $region42: #{tpu_custom_call.1} parent=0
    _
  %s8 = ssub.s32 1, %s6
  %s9 = scalar_select 0, %s8, %s6
  $region1: #{tpu_custom_call.1} parent=0
    #allocation2 [shape = 'u8[57344]{0}', space=vmem, size = 0xe000, scoped, tag = 'input window, operand 0, single buffered']
    #allocation3 [shape = 's32[1]{0}', space=sflag, size = 0x4, scoped, tag = 'scoped memory for tpu_custom_call.1']
    #allocation4 [shape = 's32[1]{0}', space=sflag, size = 0x4, scoped, tag = 'scoped memory for tpu_custom_call.1']
    #allocation5 [shape = 'u8[200704]{0}', space=vmem, size = 0x31000, scoped, tag = 'input window, operand 1, single buffered']
    #allocation6 [shape = 's32[1]{0}', space=sflag, size = 0x4, scoped, tag = 'scoped memory for tpu_custom_call.1']
    #allocation7 [shape = 'u8[32768]{0}', space=vmem, size = 0x8000, scoped, tag = 'input window, operand 3, single buffered']
    #allocation8 [shape = 'u8[4096]{0}', space=vmem, size = 0x1000, scoped, tag = 'output window, operand 0, single buffered']
    %10 = vsyncpa [#allocation3], 0
    %11 = vsyncpa [#allocation6], 0
    %12 = vsyncpa [#allocation4], 0
    // Predicated region
    $region2: #{tpu_custom_call.1} parent=1 // pred_check
      _
    $region3: #{tpu_custom_call.1} parent=1 // pred_check_branch
      %14 = sbr.rel (0) target = $region5
    $region4: #{tpu_custom_call.1} parent=1 // pred_region
      %s16 = ssub.s32 1792, 448
      %17 = vsyncadd [#allocation3], %s16
      %s18 = sshll.u32 [#allocation2], 4
      %s19 = int_to_ptr.vmem [resolvable:$true] %s18
      %24 = dma.hbm_to_vmem [thread:$0]  %s0, 448, %s19, [#allocation3], 448, 448, 28
    $region5: #{tpu_custom_call.1} parent=1 // pred_fallthru
      _
    // Predicated region
    $region6: #{tpu_custom_call.1} parent=1 // pred_check
      _
    $region7: #{tpu_custom_call.1} parent=1 // pred_check_branch
      %26 = sbr.rel (0) target = $region9
    $region8: #{tpu_custom_call.1} parent=1 // pred_region
      %s28 = ssub.s32 6272, 6272
      %29 = vsyncadd [#allocation6], %s28
      %s30 = sshll.u32 [#allocation5], 4
      %s31 = int_to_ptr.vmem [resolvable:$true] %s30
      %36 = dma.hbm_to_vmem [thread:$0]  %s1, 6272, %s31, [#allocation6], 64, 64, 4
    $region9: #{tpu_custom_call.1} parent=1 // pred_fallthru
      _
    // Predicated region
    $region10: #{tpu_custom_call.1} parent=1 // pred_check
      _
    $region11: #{tpu_custom_call.1} parent=1 // pred_check_branch
      %38 = sbr.rel (0) target = $region13
    $region12: #{tpu_custom_call.1} parent=1 // pred_region
      _
    $region13: #{tpu_custom_call.1} parent=1 // pred_fallthru
      _
    // Predicated region
    $region14: #{tpu_custom_call.1} parent=1 // pred_check
      _
    $region15: #{tpu_custom_call.1} parent=1 // pred_check_branch
      %40 = sbr.rel (0) target = $region17
    $region16: #{tpu_custom_call.1} parent=1 // pred_region
      %s42 = ssub.s32 1024, 1024
      %43 = vsyncadd [#allocation6], %s42
      %s44 = sshll.u32 [#allocation7], 4
      %s45 = int_to_ptr.vmem [resolvable:$true] %s44
      %50 = dma.hbm_to_vmem [thread:$0]  %s3, 1024, %s45, [#allocation6], 64, 64, 4
    $region17: #{tpu_custom_call.1} parent=1 // pred_fallthru
      _
    // Predicated region
    $region18: #{tpu_custom_call.1} parent=1 // pred_check
      _
    $region19: #{tpu_custom_call.1} parent=1 // pred_check_branch
      %52 = sbr.rel (0) target = $region21
    $region20: #{tpu_custom_call.1} parent=1 // pred_region
      _
    $region21: #{tpu_custom_call.1} parent=1 // pred_fallthru
      _
    // Predicated region
    $region22: #{tpu_custom_call.1} parent=1 // pred_check
      _
    $region23: #{tpu_custom_call.1} parent=1 // pred_check_branch
      %54 = sbr.rel (0) target = $region25
    $region24: #{tpu_custom_call.1} parent=1 // pred_region
      %55 = dma.done [#allocation3], 1792
    $region25: #{tpu_custom_call.1} parent=1 // pred_fallthru
      _
    // Predicated region
    $region26: #{tpu_custom_call.1} parent=1 // pred_check
      _
    $region27: #{tpu_custom_call.1} parent=1 // pred_check_branch
      %57 = sbr.rel (0) target = $region29
    $region28: #{tpu_custom_call.1} parent=1 // pred_region
      %58 = dma.done [#allocation6], 6272
    $region29: #{tpu_custom_call.1} parent=1 // pred_fallthru
      _
    // Predicated region
    $region30: #{tpu_custom_call.1} parent=1 // pred_check
      _
    $region31: #{tpu_custom_call.1} parent=1 // pred_check_branch
      %60 = sbr.rel (0) target = $region33
    $region32: #{tpu_custom_call.1} parent=1 // pred_region
      %61 = dma.done [#allocation6], 1024
    $region33: #{tpu_custom_call.1} parent=1 // pred_fallthru
      _
    %v63 = vld [vmem:[#allocation2] sm:$0xff]
    %v64 = vld [vmem:[#allocation2 + $0x8] sm:$0xff]
    %v65 = vld [vmem:[#allocation2 + $0x10] sm:$0xff]
    %v66 = vld [vmem:[#allocation2 + $0x18] sm:$0xf]
    %v67 = vld [vmem:[#allocation2 + $0x1c] sm:$0xff]
    %v68 = vld [vmem:[#allocation2 + $0x24] sm:$0xff]
    %v69 = vld [vmem:[#allocation2 + $0x2c] sm:$0xff]
    %v70 = vld [vmem:[#allocation2 + $0x34] sm:$0xf]
    %v71 = vld [vmem:[#allocation2 + $0x38] sm:$0xff]
    %v72 = vld [vmem:[#allocation2 + $0x40] sm:$0xff]
    %v73 = vld [vmem:[#allocation2 + $0x48] sm:$0xff]
    %v74 = vld [vmem:[#allocation2 + $0x50] sm:$0xf]
    %v75 = vld [vmem:[#allocation2 + $0x54] sm:$0xff]
    %v76 = vld [vmem:[#allocation2 + $0x5c] sm:$0xff]
    %v77 = vld [vmem:[#allocation2 + $0x64] sm:$0xff]
    %v78 = vld [vmem:[#allocation2 + $0x6c] sm:$0xf]
    %v95 = vcombine.low %v63, %v67
    %v96 = vcombine.high %v63, %v67
    %v97 = vcombine.low %v64, %v68
    %v98 = vcombine.high %v64, %v68
    %v99 = vcombine.low %v65, %v69
    %v100 = vcombine.high %v65, %v69
    %v101 = vcombine.low %v66, %v70
    %v102 = vcombine.low %v71, %v75
    %v103 = vcombine.high %v71, %v75
    %v104 = vcombine.low %v72, %v76
    %v105 = vcombine.high %v72, %v76
    %v106 = vcombine.low %v73, %v77
    %v107 = vcombine.high %v73, %v77
    %v108 = vcombine.low %v74, %v78
    %v123 = vpack.c.bf16 %v102, %v95
    %v124 = vpack.c.bf16 %v103, %v96
    %v125 = vpack.c.bf16 %v104, %v97
    %v126 = vpack.c.bf16 %v105, %v98
    %v127 = vpack.c.bf16 %v106, %v99
    %v128 = vpack.c.bf16 %v107, %v100
    %v129 = vpack.c.bf16 %v108, %v101
    %v130 = vld [vmem:[#allocation5] sm:$0xf]
    %v131 = vld [vmem:[#allocation5 + $0x4] sm:$0xf]
    %v132 = vld [vmem:[#allocation5 + $0x8] sm:$0xf]
    %v133 = vld [vmem:[#allocation5 + $0xc] sm:$0xf]
    %v134 = vld [vmem:[#allocation5 + $0x10] sm:$0xf]
    %v135 = vld [vmem:[#allocation5 + $0x14] sm:$0xf]
    %v136 = vld [vmem:[#allocation5 + $0x18] sm:$0xf]
    %v137 = vld [vmem:[#allocation5 + $0x1c] sm:$0xf]
    %v138 = vld [vmem:[#allocation5 + $0x20] sm:$0xf]
    %v139 = vld [vmem:[#allocation5 + $0x24] sm:$0xf]
    %v140 = vld [vmem:[#allocation5 + $0x28] sm:$0xf]
    %v141 = vld [vmem:[#allocation5 + $0x2c] sm:$0xf]
    %v142 = vld [vmem:[#allocation5 + $0x30] sm:$0xf]
    %v143 = vld [vmem:[#allocation5 + $0x34] sm:$0xf]
    %v144 = vld [vmem:[#allocation5 + $0x38] sm:$0xf]
    %v145 = vld [vmem:[#allocation5 + $0x3c] sm:$0xf]
    %v146 = vld [vmem:[#allocation5 + $0x40] sm:$0xf]
    %v147 = vld [vmem:[#allocation5 + $0x44] sm:$0xf]
    %v148 = vld [vmem:[#allocation5 + $0x48] sm:$0xf]
    %v149 = vld [vmem:[#allocation5 + $0x4c] sm:$0xf]
    %v150 = vld [vmem:[#allocation5 + $0x50] sm:$0xf]
    %v151 = vld [vmem:[#allocation5 + $0x54] sm:$0xf]
    %v152 = vld [vmem:[#allocation5 + $0x58] sm:$0xf]
    %v153 = vld [vmem:[#allocation5 + $0x5c] sm:$0xf]
    %v154 = vld [vmem:[#allocation5 + $0x60] sm:$0xf]
    %v155 = vld [vmem:[#allocation5 + $0x64] sm:$0xf]
    %v156 = vld [vmem:[#allocation5 + $0x68] sm:$0xf]
    %v157 = vld [vmem:[#allocation5 + $0x6c] sm:$0xf]
    %v158 = vld [vmem:[#allocation5 + $0x70] sm:$0xf]
    %v159 = vld [vmem:[#allocation5 + $0x74] sm:$0xf]
    %v160 = vld [vmem:[#allocation5 + $0x78] sm:$0xf]
    %v161 = vld [vmem:[#allocation5 + $0x7c] sm:$0xf]
    %v162 = vld [vmem:[#allocation5 + $0x80] sm:$0xf]
    %v163 = vld [vmem:[#allocation5 + $0x84] sm:$0xf]
    %v164 = vld [vmem:[#allocation5 + $0x88] sm:$0xf]
    %v165 = vld [vmem:[#allocation5 + $0x8c] sm:$0xf]
    %v166 = vld [vmem:[#allocation5 + $0x90] sm:$0xf]
    %v167 = vld [vmem:[#allocation5 + $0x94] sm:$0xf]
    %v168 = vld [vmem:[#allocation5 + $0x98] sm:$0xf]
    %v169 = vld [vmem:[#allocation5 + $0x9c] sm:$0xf]
    %v170 = vld [vmem:[#allocation5 + $0xa0] sm:$0xf]
    %v171 = vld [vmem:[#allocation5 + $0xa4] sm:$0xf]
    %v172 = vld [vmem:[#allocation5 + $0xa8] sm:$0xf]
    %v173 = vld [vmem:[#allocation5 + $0xac] sm:$0xf]
    %v174 = vld [vmem:[#allocation5 + $0xb0] sm:$0xf]
    %v175 = vld [vmem:[#allocation5 + $0xb4] sm:$0xf]
    %v176 = vld [vmem:[#allocation5 + $0xb8] sm:$0xf]
    %v177 = vld [vmem:[#allocation5 + $0xbc] sm:$0xf]
    %v178 = vld [vmem:[#allocation5 + $0xc0] sm:$0xf]
    %v179 = vld [vmem:[#allocation5 + $0xc4] sm:$0xf]
    %v180 = vld [vmem:[#allocation5 + $0xc8] sm:$0xf]
    %v181 = vld [vmem:[#allocation5 + $0xcc] sm:$0xf]
    %v182 = vld [vmem:[#allocation5 + $0xd0] sm:$0xf]
    %v183 = vld [vmem:[#allocation5 + $0xd4] sm:$0xf]
    %v184 = vld [vmem:[#allocation5 + $0xd8] sm:$0xf]
    %v185 = vld [vmem:[#allocation5 + $0xdc] sm:$0xf]
    %v186 = vld [vmem:[#allocation5 + $0xe0] sm:$0xf]
    %v187 = vld [vmem:[#allocation5 + $0xe4] sm:$0xf]
    %v188 = vld [vmem:[#allocation5 + $0xe8] sm:$0xf]
    %v189 = vld [vmem:[#allocation5 + $0xec] sm:$0xf]
    %v190 = vld [vmem:[#allocation5 + $0xf0] sm:$0xf]
    %v191 = vld [vmem:[#allocation5 + $0xf4] sm:$0xf]
    %v192 = vld [vmem:[#allocation5 + $0xf8] sm:$0xf]
    %v193 = vld [vmem:[#allocation5 + $0xfc] sm:$0xf]
    %v194 = vld [vmem:[#allocation5 + $0x100] sm:$0xf]
    %v195 = vld [vmem:[#allocation5 + $0x104] sm:$0xf]
    %v196 = vld [vmem:[#allocation5 + $0x108] sm:$0xf]
    %v197 = vld [vmem:[#allocation5 + $0x10c] sm:$0xf]
    %v198 = vld [vmem:[#allocation5 + $0x110] sm:$0xf]
    %v199 = vld [vmem:[#allocation5 + $0x114] sm:$0xf]
    %v200 = vld [vmem:[#allocation5 + $0x118] sm:$0xf]
    %v201 = vld [vmem:[#allocation5 + $0x11c] sm:$0xf]
    %v202 = vld [vmem:[#allocation5 + $0x120] sm:$0xf]
    %v203 = vld [vmem:[#allocation5 + $0x124] sm:$0xf]
    %v204 = vld [vmem:[#allocation5 + $0x128] sm:$0xf]
    %v205 = vld [vmem:[#allocation5 + $0x12c] sm:$0xf]
    %v206 = vld [vmem:[#allocation5 + $0x130] sm:$0xf]
    %v207 = vld [vmem:[#allocation5 + $0x134] sm:$0xf]
    %v208 = vld [vmem:[#allocation5 + $0x138] sm:$0xf]
    %v209 = vld [vmem:[#allocation5 + $0x13c] sm:$0xf]
    %v210 = vld [vmem:[#allocation5 + $0x140] sm:$0xf]
    %v211 = vld [vmem:[#allocation5 + $0x144] sm:$0xf]
    %v212 = vld [vmem:[#allocation5 + $0x148] sm:$0xf]
    %v213 = vld [vmem:[#allocation5 + $0x14c] sm:$0xf]
    %v214 = vld [vmem:[#allocation5 + $0x150] sm:$0xf]
    %v215 = vld [vmem:[#allocation5 + $0x154] sm:$0xf]
    %v216 = vld [vmem:[#allocation5 + $0x158] sm:$0xf]
    %v217 = vld [vmem:[#allocation5 + $0x15c] sm:$0xf]
    %v218 = vld [vmem:[#allocation5 + $0x160] sm:$0xf]
    %v219 = vld [vmem:[#allocation5 + $0x164] sm:$0xf]
    %v220 = vld [vmem:[#allocation5 + $0x168] sm:$0xf]
    %v221 = vld [vmem:[#allocation5 + $0x16c] sm:$0xf]
    %v222 = vld [vmem:[#allocation5 + $0x170] sm:$0xf]
    %v223 = vld [vmem:[#allocation5 + $0x174] sm:$0xf]
    %v224 = vld [vmem:[#allocation5 + $0x178] sm:$0xf]
    %v225 = vld [vmem:[#allocation5 + $0x17c] sm:$0xf]
    %v226 = vld [vmem:[#allocation5 + $0x180] sm:$0xf]
    %v227 = vld [vmem:[#allocation5 + $0x184] sm:$0xf]
    %v228 = vld [vmem:[%s2] sm:$0x1]
    %v230 = vlaneseq
    %v231 = vshrl.u32 %v230, 7
    %v232 = vsub.s32 0, %v231
    %v233 = vrot.slane %v228, %v232
    %v333 = vunpack.c.l.b16 %v130
    %v334 = vunpack.c.l.b16 %v131
    %v335 = vunpack.c.l.b16 %v132
    %v336 = vunpack.c.l.b16 %v133
    %v337 = vunpack.c.l.b16 %v134
    %v338 = vunpack.c.l.b16 %v135
    %v339 = vunpack.c.l.b16 %v136
    %v340 = vunpack.c.l.b16 %v137
    %v341 = vunpack.c.l.b16 %v138
    %v342 = vunpack.c.l.b16 %v139
    %v343 = vunpack.c.l.b16 %v140
    %v344 = vunpack.c.l.b16 %v141
    %v345 = vunpack.c.l.b16 %v142
    %v346 = vunpack.c.l.b16 %v143
    %v347 = vunpack.c.l.b16 %v144
    %v348 = vunpack.c.l.b16 %v145
    %v349 = vunpack.c.l.b16 %v146
    %v350 = vunpack.c.l.b16 %v147
    %v351 = vunpack.c.l.b16 %v148
    %v352 = vunpack.c.l.b16 %v149
    %v353 = vunpack.c.l.b16 %v150
    %v354 = vunpack.c.l.b16 %v151
    %v355 = vunpack.c.l.b16 %v152
    %v356 = vunpack.c.l.b16 %v153
    %v357 = vunpack.c.l.b16 %v154
    %v358 = vunpack.c.l.b16 %v155
    %v359 = vunpack.c.l.b16 %v156
    %v360 = vunpack.c.l.b16 %v157
    %v361 = vunpack.c.l.b16 %v158
    %v362 = vunpack.c.l.b16 %v159
    %v363 = vunpack.c.l.b16 %v160
    %v364 = vunpack.c.l.b16 %v161
    %v365 = vunpack.c.l.b16 %v162
    %v366 = vunpack.c.l.b16 %v163
    %v367 = vunpack.c.l.b16 %v164
    %v368 = vunpack.c.l.b16 %v165
    %v369 = vunpack.c.l.b16 %v166
    %v370 = vunpack.c.l.b16 %v167
    %v371 = vunpack.c.l.b16 %v168
    %v372 = vunpack.c.l.b16 %v169
    %v373 = vunpack.c.l.b16 %v170
    %v374 = vunpack.c.l.b16 %v171
    %v375 = vunpack.c.l.b16 %v172
    %v376 = vunpack.c.l.b16 %v173
    %v377 = vunpack.c.l.b16 %v174
    %v378 = vunpack.c.l.b16 %v175
    %v379 = vunpack.c.l.b16 %v176
    %v380 = vunpack.c.l.b16 %v177
    %v381 = vunpack.c.l.b16 %v178
    %v382 = vunpack.c.l.b16 %v179
    %v383 = vunpack.c.l.b16 %v180
    %v384 = vunpack.c.l.b16 %v181
    %v385 = vunpack.c.l.b16 %v182
    %v386 = vunpack.c.l.b16 %v183
    %v387 = vunpack.c.l.b16 %v184
    %v388 = vunpack.c.l.b16 %v185
    %v389 = vunpack.c.l.b16 %v186
    %v390 = vunpack.c.l.b16 %v187
    %v391 = vunpack.c.l.b16 %v188
    %v392 = vunpack.c.l.b16 %v189
    %v393 = vunpack.c.l.b16 %v190
    %v394 = vunpack.c.l.b16 %v191
    %v395 = vunpack.c.l.b16 %v192
    %v396 = vunpack.c.l.b16 %v193
    %v397 = vunpack.c.l.b16 %v194
    %v398 = vunpack.c.l.b16 %v195
    %v399 = vunpack.c.l.b16 %v196
    %v400 = vunpack.c.l.b16 %v197
    %v401 = vunpack.c.l.b16 %v198
    %v402 = vunpack.c.l.b16 %v199
    %v403 = vunpack.c.l.b16 %v200
    %v404 = vunpack.c.l.b16 %v201
    %v405 = vunpack.c.l.b16 %v202
    %v406 = vunpack.c.l.b16 %v203
    %v407 = vunpack.c.l.b16 %v204
    %v408 = vunpack.c.l.b16 %v205
    %v409 = vunpack.c.l.b16 %v206
    %v410 = vunpack.c.l.b16 %v207
    %v411 = vunpack.c.l.b16 %v208
    %v412 = vunpack.c.l.b16 %v209
    %v413 = vunpack.c.l.b16 %v210
    %v414 = vunpack.c.l.b16 %v211
    %v415 = vunpack.c.l.b16 %v212
    %v416 = vunpack.c.l.b16 %v213
    %v417 = vunpack.c.l.b16 %v214
    %v418 = vunpack.c.l.b16 %v215
    %v419 = vunpack.c.l.b16 %v216
    %v420 = vunpack.c.l.b16 %v217
    %v421 = vunpack.c.l.b16 %v218
    %v422 = vunpack.c.l.b16 %v219
    %v423 = vunpack.c.l.b16 %v220
    %v424 = vunpack.c.l.b16 %v221
    %v425 = vunpack.c.l.b16 %v222
    %v426 = vunpack.c.l.b16 %v223
    %v427 = vunpack.c.l.b16 %v224
    %v428 = vunpack.c.l.b16 %v225
    %v429 = vunpack.c.l.b16 %v226
    %v430 = vunpack.c.l.b16 %v227
    %v431 = vpack.c.b16 %v334, %v333
    %v432 = vpack.c.b16 %v336, %v335
    %v433 = vpack.c.b16 %v338, %v337
    %v434 = vpack.c.b16 %v340, %v339
    %v435 = vpack.c.b16 %v342, %v341
    %v436 = vpack.c.b16 %v344, %v343
    %v437 = vpack.c.b16 %v346, %v345
    %v438 = vpack.c.b16 %v348, %v347
    %v439 = vpack.c.b16 %v350, %v349
    %v440 = vpack.c.b16 %v352, %v351
    %v441 = vpack.c.b16 %v354, %v353
    %v442 = vpack.c.b16 %v356, %v355
    %v443 = vpack.c.b16 %v358, %v357
    %v444 = vpack.c.b16 %v360, %v359
    %v445 = vpack.c.b16 %v362, %v361
    %v446 = vpack.c.b16 %v364, %v363
    %v447 = vpack.c.b16 %v366, %v365
    %v448 = vpack.c.b16 %v368, %v367
    %v449 = vpack.c.b16 %v370, %v369
    %v450 = vpack.c.b16 %v372, %v371
    %v451 = vpack.c.b16 %v374, %v373
    %v452 = vpack.c.b16 %v376, %v375
    %v453 = vpack.c.b16 %v378, %v377
    %v454 = vpack.c.b16 %v380, %v379
    %v455 = vpack.c.b16 %v382, %v381
    %v456 = vpack.c.b16 %v384, %v383
    %v457 = vpack.c.b16 %v386, %v385
    %v458 = vpack.c.b16 %v388, %v387
    %v459 = vpack.c.b16 %v390, %v389
    %v460 = vpack.c.b16 %v392, %v391
    %v461 = vpack.c.b16 %v394, %v393
    %v462 = vpack.c.b16 %v396, %v395
    %v463 = vpack.c.b16 %v398, %v397
    %v464 = vpack.c.b16 %v400, %v399
    %v465 = vpack.c.b16 %v402, %v401
    %v466 = vpack.c.b16 %v404, %v403
    %v467 = vpack.c.b16 %v406, %v405
    %v468 = vpack.c.b16 %v408, %v407
    %v469 = vpack.c.b16 %v410, %v409
    %v470 = vpack.c.b16 %v412, %v411
    %v471 = vpack.c.b16 %v414, %v413
    %v472 = vpack.c.b16 %v416, %v415
    %v473 = vpack.c.b16 %v418, %v417
    %v474 = vpack.c.b16 %v420, %v419
    %v475 = vpack.c.b16 %v422, %v421
    %v476 = vpack.c.b16 %v424, %v423
    %v477 = vpack.c.b16 %v426, %v425
    %v478 = vpack.c.b16 %v428, %v427
    %v479 = vpack.c.b16 %v430, %v429
    %vm529 = vcmask 130048
    %v531 = vsel %vm529, %v129, 0
    %533 = vmatprep.subr.bf16.mxu0 0
    %534 = vmatpush1.bf16.msra.mxu0 %v431
    %535 = vmatprep.subr.bf16.mxu0 0
    %536 = vmatpush1.bf16.msra.mxu0 %v432
    %537 = vmatprep.subr.bf16.mxu0 0
    %538 = vmatpush1.bf16.msra.mxu0 %v433
    %539 = vmatprep.subr.bf16.mxu0 0
    %540 = vmatpush1.bf16.msra.mxu0 %v434
    %541 = vmatprep.subr.bf16.mxu0 0
    %542 = vmatpush1.bf16.msra.mxu0 %v435
    %543 = vmatprep.subr.bf16.mxu0 0
    %544 = vmatpush1.bf16.msra.mxu0 %v436
    %545 = vmatprep.subr.bf16.mxu0 0
    %546 = vmatpush1.bf16.msra.mxu0 %v437
    %547 = vmatprep.subr.bf16.mxu0 0
    %548 = vmatpush1.bf16.msra.mxu0 %v438
    %549 = vmatprep.subr.bf16.mxu0 0
    %550 = vmatpush1.bf16.msra.mxu0 %v439
    %551 = vmatprep.subr.bf16.mxu0 0
    %552 = vmatpush1.bf16.msra.mxu0 %v440
    %553 = vmatprep.subr.bf16.mxu0 0
    %554 = vmatpush1.bf16.msra.mxu0 %v441
    %555 = vmatprep.subr.bf16.mxu0 0
    %556 = vmatpush1.bf16.msra.mxu0 %v442
    %557 = vmatprep.subr.bf16.mxu0 0
    %558 = vmatpush1.bf16.msra.mxu0 %v443
    %559 = vmatprep.subr.bf16.mxu0 0
    %560 = vmatpush1.bf16.msra.mxu0 %v444
    %561 = vmatprep.subr.bf16.mxu0 0
    %562 = vmatpush1.bf16.msra.mxu0 %v445
    %563 = vmatprep.subr.bf16.mxu0 0
    %564 = vmatpush1.bf16.msra.mxu0 %v446
    %565 = vmatprep.mubr.bf16.mxu0 %v124
    %566 = vmatmul.mubr.bf16.gmra.mrb[0].mxu0 %v123
    %v567 = vpop.f32.mrb[0].mxu0
    %v568 = vadd.f32 %v233, %v567
    %v569 = vpop.f32.mrb[0].mxu0
    %v570 = vpop.f32.mrb[0].mxu0
    %v571 = vadd.f32 %v233, %v570
    %v572 = vpop.f32.mrb[0].mxu0
    %573 = vdwg.mxu0
    %574 = vmatprep.subr.bf16.mxu0 0
    %575 = vmatpush1.bf16.msra.mxu0 %v447
    %576 = vmatprep.subr.bf16.mxu0 0
    %577 = vmatpush1.bf16.msra.mxu0 %v448
    %578 = vmatprep.subr.bf16.mxu0 0
    %579 = vmatpush1.bf16.msra.mxu0 %v449
    %580 = vmatprep.subr.bf16.mxu0 0
    %581 = vmatpush1.bf16.msra.mxu0 %v450
    %582 = vmatprep.subr.bf16.mxu0 0
    %583 = vmatpush1.bf16.msra.mxu0 %v451
    %584 = vmatprep.subr.bf16.mxu0 0
    %585 = vmatpush1.bf16.msra.mxu0 %v452
    %586 = vmatprep.subr.bf16.mxu0 0
    %587 = vmatpush1.bf16.msra.mxu0 %v453
    %588 = vmatprep.subr.bf16.mxu0 0
    %589 = vmatpush1.bf16.msra.mxu0 %v454
    %590 = vmatprep.subr.bf16.mxu0 0
    %591 = vmatpush1.bf16.msra.mxu0 %v455
    %592 = vmatprep.subr.bf16.mxu0 0
    %593 = vmatpush1.bf16.msra.mxu0 %v456
    %594 = vmatprep.subr.bf16.mxu0 0
    %595 = vmatpush1.bf16.msra.mxu0 %v457
    %596 = vmatprep.subr.bf16.mxu0 0
    %597 = vmatpush1.bf16.msra.mxu0 %v458
    %598 = vmatprep.subr.bf16.mxu0 0
    %599 = vmatpush1.bf16.msra.mxu0 %v459
    %600 = vmatprep.subr.bf16.mxu0 0
    %601 = vmatpush1.bf16.msra.mxu0 %v460
    %602 = vmatprep.subr.bf16.mxu0 0
    %603 = vmatpush1.bf16.msra.mxu0 %v461
    %604 = vmatprep.subr.bf16.mxu0 0
    %605 = vmatpush1.bf16.msra.mxu0 %v462
    %606 = vmatprep.mubr.bf16.mxu0 %v126
    %607 = vmatmul.mubr.bf16.gmra.mrb[0].mxu0 %v125
    %v608 = vpop.f32.mrb[0].mxu0
    %v609 = vadd.f32 %v568, %v608
    %v610 = vpop.f32.mrb[0].mxu0
    %v611 = vpop.f32.mrb[0].mxu0
    %v612 = vadd.f32 %v571, %v611
    %v613 = vpop.f32.mrb[0].mxu0
    %614 = vdwg.mxu0
    %615 = vmatprep.subr.bf16.mxu0 0
    %616 = vmatpush1.bf16.msra.mxu0 %v463
    %617 = vmatprep.subr.bf16.mxu0 0
    %618 = vmatpush1.bf16.msra.mxu0 %v464
    %619 = vmatprep.subr.bf16.mxu0 0
    %620 = vmatpush1.bf16.msra.mxu0 %v465
    %621 = vmatprep.subr.bf16.mxu0 0
    %622 = vmatpush1.bf16.msra.mxu0 %v466
    %623 = vmatprep.subr.bf16.mxu0 0
    %624 = vmatpush1.bf16.msra.mxu0 %v467
    %625 = vmatprep.subr.bf16.mxu0 0
    %626 = vmatpush1.bf16.msra.mxu0 %v468
    %627 = vmatprep.subr.bf16.mxu0 0
    %628 = vmatpush1.bf16.msra.mxu0 %v469
    %629 = vmatprep.subr.bf16.mxu0 0
    %630 = vmatpush1.bf16.msra.mxu0 %v470
    %631 = vmatprep.subr.bf16.mxu0 0
    %632 = vmatpush1.bf16.msra.mxu0 %v471
    %633 = vmatprep.subr.bf16.mxu0 0
    %634 = vmatpush1.bf16.msra.mxu0 %v472
    %635 = vmatprep.subr.bf16.mxu0 0
    %636 = vmatpush1.bf16.msra.mxu0 %v473
    %637 = vmatprep.subr.bf16.mxu0 0
    %638 = vmatpush1.bf16.msra.mxu0 %v474
    %639 = vmatprep.subr.bf16.mxu0 0
    %640 = vmatpush1.bf16.msra.mxu0 %v475
    %641 = vmatprep.subr.bf16.mxu0 0
    %642 = vmatpush1.bf16.msra.mxu0 %v476
    %643 = vmatprep.subr.bf16.mxu0 0
    %644 = vmatpush1.bf16.msra.mxu0 %v477
    %645 = vmatprep.subr.bf16.mxu0 0
    %646 = vmatpush1.bf16.msra.mxu0 %v478
    %647 = vmatprep.mubr.bf16.mxu0 %v128
    %648 = vmatmul.mubr.bf16.gmra.mrb[0].mxu0 %v127
    %v649 = vpop.f32.mrb[0].mxu0
    %v650 = vadd.f32 %v609, %v649
    %v651 = vpop.f32.mrb[0].mxu0
    %v652 = vpop.f32.mrb[0].mxu0
    %v653 = vadd.f32 %v612, %v652
    %v654 = vpop.f32.mrb[0].mxu0
    %655 = vdwg.mxu0
    %656 = vmatprep.subr.bf16.mxu0 0
    %657 = vmatpush1.bf16.msra.mxu0 %v479
    %658 = vmatprep.subr.bf16.mxu0 0
    %659 = vmatpush1.bf16.msra.mxu0 0
    %660 = vmatprep.subr.bf16.mxu0 0
    %661 = vmatpush1.bf16.msra.mxu0 0
    %662 = vmatprep.subr.bf16.mxu0 0
    %663 = vmatpush1.bf16.msra.mxu0 0
    %664 = vmatprep.subr.bf16.mxu0 0
    %665 = vmatpush1.bf16.msra.mxu0 0
    %666 = vmatprep.subr.bf16.mxu0 0
    %667 = vmatpush1.bf16.msra.mxu0 0
    %668 = vmatprep.subr.bf16.mxu0 0
    %669 = vmatpush1.bf16.msra.mxu0 0
    %670 = vmatprep.subr.bf16.mxu0 0
    %671 = vmatpush1.bf16.msra.mxu0 0
    %672 = vmatprep.subr.bf16.mxu0 0
    %673 = vmatpush1.bf16.msra.mxu0 0
    %674 = vmatprep.subr.bf16.mxu0 0
    %675 = vmatpush1.bf16.msra.mxu0 0
    %676 = vmatprep.subr.bf16.mxu0 0
    %677 = vmatpush1.bf16.msra.mxu0 0
    %678 = vmatprep.subr.bf16.mxu0 0
    %679 = vmatpush1.bf16.msra.mxu0 0
    %680 = vmatprep.subr.bf16.mxu0 0
    %681 = vmatpush1.bf16.msra.mxu0 0
    %682 = vmatprep.subr.bf16.mxu0 0
    %683 = vmatpush1.bf16.msra.mxu0 0
    %684 = vmatprep.subr.bf16.mxu0 0
    %685 = vmatpush1.bf16.msra.mxu0 0
    %686 = vmatprep.subr.bf16.mxu0 0
    %687 = vmatpush1.bf16.msra.mxu0 0
    %688 = vmatprep.mubr.bf16.mxu0 0
    %689 = vmatmul.mubr.bf16.gmra.mrb[0].mxu0 %v531
    %v690 = vpop.f32.mrb[0].mxu0
    %v691 = vadd.f32 %v650, %v690
    %v692 = vpop.f32.mrb[0].mxu0
    %v693 = vpop.f32.mrb[0].mxu0
    %v694 = vadd.f32 %v653, %v693
    %v695 = vpop.f32.mrb[0].mxu0
    %696 = vdwg.mxu0
    %v697 = vmax.f32 %v691, 0.0
    %v698 = vmax.f32 %v694, 0.0
    %v699 = vpack.c.bf16 %v698, %v697
    %v700 = vld [vmem:[#allocation7] sm:$0xf]
    %v701 = vld [vmem:[#allocation7 + $0x4] sm:$0xf]
    %v702 = vld [vmem:[#allocation7 + $0x8] sm:$0xf]
    %v703 = vld [vmem:[#allocation7 + $0xc] sm:$0xf]
    %v704 = vld [vmem:[#allocation7 + $0x10] sm:$0xf]
    %v705 = vld [vmem:[#allocation7 + $0x14] sm:$0xf]
    %v706 = vld [vmem:[#allocation7 + $0x18] sm:$0xf]
    %v707 = vld [vmem:[#allocation7 + $0x1c] sm:$0xf]
    %v708 = vld [vmem:[#allocation7 + $0x20] sm:$0xf]
    %v709 = vld [vmem:[#allocation7 + $0x24] sm:$0xf]
    %v710 = vld [vmem:[#allocation7 + $0x28] sm:$0xf]
    %v711 = vld [vmem:[#allocation7 + $0x2c] sm:$0xf]
    %v712 = vld [vmem:[#allocation7 + $0x30] sm:$0xf]
    %v713 = vld [vmem:[#allocation7 + $0x34] sm:$0xf]
    %v714 = vld [vmem:[#allocation7 + $0x38] sm:$0xf]
    %v715 = vld [vmem:[#allocation7 + $0x3c] sm:$0xf]
    %v716 = vld [vmem:[%s4] sm:$0x1]
    %v718 = vlaneseq
    %v719 = vshrl.u32 %v718, 7
    %v720 = vsub.s32 0, %v719
    %v721 = vrot.slane %v716, %v720
    %v739 = vunpack.c.l.b16 %v700
    %v740 = vunpack.c.l.b16 %v701
    %v741 = vunpack.c.l.b16 %v702
    %v742 = vunpack.c.l.b16 %v703
    %v743 = vunpack.c.l.b16 %v704
    %v744 = vunpack.c.l.b16 %v705
    %v745 = vunpack.c.l.b16 %v706
    %v746 = vunpack.c.l.b16 %v707
    %v747 = vunpack.c.l.b16 %v708
    %v748 = vunpack.c.l.b16 %v709
    %v749 = vunpack.c.l.b16 %v710
    %v750 = vunpack.c.l.b16 %v711
    %v751 = vunpack.c.l.b16 %v712
    %v752 = vunpack.c.l.b16 %v713
    %v753 = vunpack.c.l.b16 %v714
    %v754 = vunpack.c.l.b16 %v715
    %v755 = vpack.c.b16 %v740, %v739
    %v756 = vpack.c.b16 %v742, %v741
    %v757 = vpack.c.b16 %v744, %v743
    %v758 = vpack.c.b16 %v746, %v745
    %v759 = vpack.c.b16 %v748, %v747
    %v760 = vpack.c.b16 %v750, %v749
    %v761 = vpack.c.b16 %v752, %v751
    %v762 = vpack.c.b16 %v754, %v753
    %771 = vmatprep.subr.bf16.mxu0 0
    %772 = vmatpush1.bf16.msra.mxu0 %v755
    %773 = vmatprep.subr.bf16.mxu0 0
    %774 = vmatpush1.bf16.msra.mxu0 %v756
    %775 = vmatprep.subr.bf16.mxu0 0
    %776 = vmatpush1.bf16.msra.mxu0 %v757
    %777 = vmatprep.subr.bf16.mxu0 0
    %778 = vmatpush1.bf16.msra.mxu0 %v758
    %779 = vmatprep.subr.bf16.mxu0 0
    %780 = vmatpush1.bf16.msra.mxu0 %v759
    %781 = vmatprep.subr.bf16.mxu0 0
    %782 = vmatpush1.bf16.msra.mxu0 %v760
    %783 = vmatprep.subr.bf16.mxu0 0
    %784 = vmatpush1.bf16.msra.mxu0 %v761
    %785 = vmatprep.subr.bf16.mxu0 0
    %786 = vmatpush1.bf16.msra.mxu0 %v762
    %787 = vmatprep.subr.bf16.mxu0 0
    %788 = vmatpush1.bf16.msra.mxu0 0
    %789 = vmatprep.subr.bf16.mxu0 0
    %790 = vmatpush1.bf16.msra.mxu0 0
    %791 = vmatprep.subr.bf16.mxu0 0
    %792 = vmatpush1.bf16.msra.mxu0 0
    %793 = vmatprep.subr.bf16.mxu0 0
    %794 = vmatpush1.bf16.msra.mxu0 0
    %795 = vmatprep.subr.bf16.mxu0 0
    %796 = vmatpush1.bf16.msra.mxu0 0
    %797 = vmatprep.subr.bf16.mxu0 0
    %798 = vmatpush1.bf16.msra.mxu0 0
    %799 = vmatprep.subr.bf16.mxu0 0
    %800 = vmatpush1.bf16.msra.mxu0 0
    %801 = vmatprep.subr.bf16.mxu0 0
    %802 = vmatpush1.bf16.msra.mxu0 0
    %803 = vmatprep.mubr.bf16.mxu0 0
    %804 = vmatmul.mubr.bf16.gmra.mrb[0].mxu0 %v699
    %v805 = vpop.f32.mrb[0].mxu0
    %v806 = vadd.f32 %v721, %v805
    %v807 = vpop.f32.mrb[0].mxu0
    %v808 = vpop.f32.mrb[0].mxu0
    %v809 = vadd.f32 %v721, %v808
    %v810 = vpop.f32.mrb[0].mxu0
    %811 = vdwg.mxu0
    %v812 = vlaneseq
    %v813 = vand.u32 %v812, 127
    %vm814 = vcmp.lt.s32.totalorder %v813, 10
    %v815 = vsel %vm814, %v806, -inf
    %v816 = vsel %vm814, %v809, -inf
    %817 = vmax.xlane.f32.xlu0 %v815
    %v818 = vpop.xlane.xlu0 %817
    %819 = vmax.xlane.f32.xlu0 %v816
    %v820 = vpop.xlane.xlu0 %819
    %v821 = vsub.f32 %v806, %v818
    %v822 = vsub.f32 %v809, %v820
    %v823 = vmul.f32 %v821, 1.442695
    %v824 = vpow.pop %v823
    %v825 = vmul.f32 %v822, 1.442695
    %v826 = vpow.pop %v825
    %v827 = vsel %vm814, %v824, 0.0
    %v828 = vsel %vm814, %v826, 0.0
    %829 = vadd.xlane.f32.xlu0 %v827
    %v830 = vpop.xlane.xlu0 %829
    %831 = vadd.xlane.f32.xlu0 %v828
    %v832 = vpop.xlane.xlu0 %831
    %v833 = vlog2.pop %v830
    %v834 = vmul.f32 %v833, 0.6931472
    %v835 = vlog2.pop %v832
    %v836 = vmul.f32 %v835, 0.6931472
    %v837 = vsub.f32 %v821, %v834
    %v838 = vsub.f32 %v822, %v836
    %v839 = vsel %vm814, %v837, 0.0
    %v840 = vsel %vm814, %v838, 0.0
    %v841 = vpack.c.bf16 %v840, %v839
    %v843 = vcombine.high %v841, %v841
    %v845 = vunpack.c.l.s4 1983009808
    %v846 = vunpack.c.0.s8 %v845
    %v847 = vlaneseq
    %v848 = vshrl.u32 %v847, 7
    %v849 = vsub.s32 %v846, %v848
    %v850 = vrot.slane %v841, %v849
    %v852 = vunpack.c.l.s4 1983009808
    %v853 = vunpack.c.0.s8 %v852
    %v854 = vlaneseq
    %v855 = vshrl.u32 %v854, 7
    %v856 = vsub.s32 %v853, %v855
    %v857 = vrot.slane %v843, %v856
    %v858 = vcombine.high %v850, %v850
    %v859 = vcombine.high %v857, %v857
    %864 = vst [vmem:[#allocation8] sm:$0x3] %v850
    %865 = vst [vmem:[#allocation8 + $0x2] sm:$0x3] %v858
    %866 = vst [vmem:[#allocation8 + $0x4] sm:$0x3] %v857
    %867 = vst [vmem:[#allocation8 + $0x6] sm:$0x3] %v859
    // Predicated region
    $region34: #{tpu_custom_call.1} parent=1 // pred_check
      _
    $region35: #{tpu_custom_call.1} parent=1 // pred_check_branch
      %869 = sbr.rel (0) target = $region37
    $region36: #{tpu_custom_call.1} parent=1 // pred_region
      %s871 = ssub.s32 128, 32
      %872 = vsyncadd [#allocation4], %s871
      %s873 = sshll.u32 [#allocation8], 4
      %s874 = int_to_ptr.vmem [resolvable:$true] %s873
      %879 = dma.vmem_to_hbm [thread:$0]  %s874, 32, %s5, [#allocation4], 32, 32, 2
    $region37: #{tpu_custom_call.1} parent=1 // pred_fallthru
      _
    // Predicated region
    $region38: #{tpu_custom_call.1} parent=1 // pred_check
      _
    $region39: #{tpu_custom_call.1} parent=1 // pred_check_branch
      %881 = sbr.rel (0) target = $region41
    $region40: #{tpu_custom_call.1} parent=1 // pred_region
      %882 = dma.done [#allocation4], 128
    $region41: #{tpu_custom_call.1} parent=1 // pred_fallthru
      _
    %883 = vsyncpa [#allocation3], 1
    %884 = vsyncpa [#allocation6], 1
    %885 = vsyncpa [#allocation4], 1

</llo_original>
